<compile_context>
chip_gen: v7x
topology: tpu7x:2x2x1
jax: 0.10.0
libtpu: 0.0.40
codegen_flags: <defaults>
</compile_context>

<pallas_src>
import jax
import jax.numpy as jnp
from jax.experimental import pallas as pl
from jax.experimental.pallas import tpu as pltpu


# ----------------------------------------------------------------------------
# Kernels
# ----------------------------------------------------------------------------
def _gcn_layer1_kernel(a_ref, x_ref, w1_ref, b1_ref, w2_ref, m2_ref, acc_ref):
    """Row-tile of M2 = (relu((A @ X) @ W1 + b1)) @ W2, accumulated over k tiles."""
    k = pl.program_id(1)

    @pl.when(k == 0)
    def _():
        acc_ref[...] = jnp.zeros_like(acc_ref)

    # bf16 operands -> MXU, f32 accumulation.
    acc_ref[...] += jnp.dot(a_ref[...], x_ref[...],
                            preferred_element_type=jnp.float32)

    @pl.when(k == pl.num_programs(1) - 1)
    def _():
        # Tiny finalize matmuls stay in f32 (weights are small and resident).
        h = jnp.dot(acc_ref[...], w1_ref[...],
                    preferred_element_type=jnp.float32) + b1_ref[...]
        h = jnp.maximum(h, 0.0)                       # activation = relu (f32)
        # dropout(p=0.0) -> identity
        m2 = jnp.dot(h, w2_ref[...], preferred_element_type=jnp.float32)
        m2_ref[...] = m2.astype(m2_ref.dtype)


def _gcn_layer2_kernel(a_ref, m2_ref, b2_ref, o_ref, acc_ref):
    """Row-tile of Y = A @ M2 + b2, accumulated over k tiles."""
    k = pl.program_id(1)

    @pl.when(k == 0)
    def _():
        acc_ref[...] = jnp.zeros_like(acc_ref)

    acc_ref[...] += jnp.dot(a_ref[...], m2_ref[...],
                            preferred_element_type=jnp.float32)

    @pl.when(k == pl.num_programs(1) - 1)
    def _():
        o_ref[...] = (acc_ref[...] + b2_ref[...]).astype(o_ref.dtype)


# ----------------------------------------------------------------------------
# Wrapper
# ----------------------------------------------------------------------------
def _round_up(x, m):
    return ((x + m - 1) // m) * m


def _plan_tiles(n):
    """Return (n_pad, tm, tk): tiles divide n_pad, sized for good HBM pipelining."""
    if n <= 512:
        n_pad = _round_up(n, 8)
        return n_pad, n_pad, n_pad          # single tile; fully resident
    n_pad = _round_up(n, 512)
    return n_pad, 256, 512                  # bf16 A tile = 256 KiB, lane axis 512


def _vmem_limit_bytes(tm, tk, f_in, hid, c_pad):
    bf, f4 = 2, 4
    l1 = (2 * tm * tk * bf            # A tile (double buffered)
          + 2 * tk * f_in * bf        # X tile
          + 2 * tm * c_pad * bf       # M2 output tile
          + tm * f_in * f4            # accumulator
          + (f_in * hid + hid + hid * c_pad) * f4 * 2)
    l2 = (2 * tm * tk * bf
          + 2 * tk * c_pad * bf
          + 2 * tm * c_pad * f4
          + tm * c_pad * f4
          + c_pad * f4 * 2)
    need = max(l1, l2)
    return int(min(max(2 * need, 8 << 20), 48 << 20))


def gcn_forward(a_hat, x, w1, b1, w2, b2):
    n, f_in = x.shape
    hid = w1.shape[1]
    c_out = w2.shape[1]
    c_pad = _round_up(max(c_out, 128), 128)     # lane-dense output slab

    n_pad, tm, tk = _plan_tiles(n)
    grid = (n_pad // tm, n_pad // tk)

    # Big N-scaled arrays: pad and cast to bf16 (half HBM traffic, MXU-native).
    a_p = jnp.pad(a_hat.astype(jnp.bfloat16), ((0, n_pad - n), (0, n_pad - n)))
    x_p = jnp.pad(x.astype(jnp.bfloat16), ((0, n_pad - n), (0, 0)))

    # Small weights stay f32; pad layer-2 weight/bias lanes to c_pad with zeros.
    b1 = b1.reshape(1, hid).astype(jnp.float32)
    w2_p = jnp.pad(w2.astype(jnp.float32), ((0, 0), (0, c_pad - c_out)))
    b2_p = jnp.pad(b2.reshape(1, c_out).astype(jnp.float32),
                   ((0, 0), (0, c_pad - c_out)))

    cparams = pltpu.CompilerParams(
        dimension_semantics=("parallel", "arbitrary"),
        vmem_limit_bytes=_vmem_limit_bytes(tm, tk, f_in, hid, c_pad),
    )

    # ---- layer 1: M2 = relu((A @ X) @ W1 + b1) @ W2 --------------------------
    m2 = pl.pallas_call(
        _gcn_layer1_kernel,
        out_shape=jax.ShapeDtypeStruct((n_pad, c_pad), jnp.bfloat16),
        grid_spec=pltpu.PrefetchScalarGridSpec(
            num_scalar_prefetch=0,
            grid=grid,
            in_specs=[
                pl.BlockSpec((tm, tk), lambda i, k: (i, k)),        # A tile
                pl.BlockSpec((tk, f_in), lambda i, k: (k, 0)),      # X tile
                pl.BlockSpec((f_in, hid), lambda i, k: (0, 0)),     # W1 (resident)
                pl.BlockSpec((1, hid), lambda i, k: (0, 0)),        # b1 (resident)
                pl.BlockSpec((hid, c_pad), lambda i, k: (0, 0)),    # W2 (resident)
            ],
            out_specs=pl.BlockSpec((tm, c_pad), lambda i, k: (i, 0)),
            scratch_shapes=[pltpu.VMEM((tm, f_in), jnp.float32)],
        ),
        compiler_params=cparams,
    )(a_p, x_p, w1.astype(jnp.float32), b1, w2_p)

    # ---- layer 2: Y = A @ M2 + b2 --------------------------------------------
    y_pad = pl.pallas_call(
        _gcn_layer2_kernel,
        out_shape=jax.ShapeDtypeStruct((n_pad, c_pad), jnp.float32),
        grid_spec=pltpu.PrefetchScalarGridSpec(
            num_scalar_prefetch=0,
            grid=grid,
            in_specs=[
                pl.BlockSpec((tm, tk), lambda i, k: (i, k)),        # A tile
                pl.BlockSpec((tk, c_pad), lambda i, k: (k, 0)),     # M2 tile
                pl.BlockSpec((1, c_pad), lambda i, k: (0, 0)),      # b2 (resident)
            ],
            out_specs=pl.BlockSpec((tm, c_pad), lambda i, k: (i, 0)),
            scratch_shapes=[pltpu.VMEM((tm, c_pad), jnp.float32)],
        ),
        compiler_params=cparams,
    )(a_p, m2, b2_p)

    return y_pad[:n, :c_out]


# ----------------------------------------------------------------------------
# Plain-JAX glue: normalized adjacency (PyG gcn_norm semantics) and init
# ----------------------------------------------------------------------------
def build_norm_adj(edge_index, num_nodes):
    """Dense D^{-1/2}(A+I)D^{-1/2} with PyG GCNConv conventions.

    edge_index[0] = source j, edge_index[1] = target i; message passing
    scatter-ADDS into the target row, so duplicate (non-self-loop) edges count
    multiple times. Self-loops are normalized to weight 1 per node
    (add_remaining_self_loops semantics).
    """
    src, dst = edge_index[0], edge_index[1]
    off_diag = (src != dst).astype(jnp.float32)
    adj = jnp.zeros((num_nodes, num_nodes), jnp.float32)
    adj = adj.at[dst, src].add(off_diag)                   # duplicates accumulate
    adj = adj + jnp.eye(num_nodes, dtype=jnp.float32)      # weight-1 self loops
    deg = adj.sum(axis=1)                                  # in-degree incl. self
    dinv = jnp.where(deg > 0, jax.lax.rsqrt(deg), 0.0)
    return dinv[:, None] * adj * dinv[None, :]


def glorot(key, shape):
    fan_in, fan_out = shape
    limit = jnp.sqrt(6.0 / (fan_in + fan_out))
    return jax.random.uniform(key, shape, jnp.float32, -limit, limit)


if __name__ == "__main__":
    # Small, deterministic problem: 64 nodes, 16 input features,
    # hidden_channels=32, out_channels=8, num_layers=2 (module default).
    N, F_IN, HID, C_OUT = 64, 16, 32, 8
    NUM_EDGES = 256

    key = jax.random.PRNGKey(0)
    kx, ke, kw1, kw2 = jax.random.split(key, 4)

    x = jax.random.normal(kx, (N, F_IN), jnp.float32)
    edge_index = jax.random.randint(ke, (2, NUM_EDGES), 0, N, jnp.int32)

    # GCNConv parameters (glorot weights, zero bias), deterministic init.
    w1 = glorot(kw1, (F_IN, HID))
    b1 = jnp.zeros((1, HID), jnp.float32)
    w2 = glorot(kw2, (HID, C_OUT))
    b2 = jnp.zeros((1, C_OUT), jnp.float32)

    a_hat = build_norm_adj(edge_index, N)

    out = gcn_forward(a_hat, x, w1, b1, w2, b2)
    jax.block_until_ready(out)

    # Reference check in plain JAX (f32). The kernel feeds bf16 A_hat/X/H into
    # the MXU (f32 accumulate), so compare with a bf16-appropriate tolerance.
    h_ref = jnp.maximum(a_hat @ (x @ w1) + b1, 0.0)
    y_ref = a_hat @ (h_ref @ w2) + b2
    assert out.shape == (N, C_OUT)
    assert jnp.allclose(out, y_ref, atol=3e-2, rtol=3e-2), "mismatch vs reference"

    print("KERNEL_OK")
</pallas_src>

<mosaic_0001>
module attributes {stable_mosaic.version = 11 : i64} {
  func.func @_gcn_layer1_kernel(%arg0: i32, %arg1: i32, %arg2: memref<64x64xbf16, #tpu.memory_space<vmem>>, %arg3: memref<64x16xbf16, #tpu.memory_space<vmem>>, %arg4: memref<16x32xf32, #tpu.memory_space<vmem>>, %arg5: memref<1x32xf32, #tpu.memory_space<vmem>>, %arg6: memref<32x128xf32, #tpu.memory_space<vmem>>, %arg7: memref<64x128xbf16, #tpu.memory_space<vmem>>, %arg8: memref<64x16xf32, #tpu.memory_space<vmem>>) attributes {dimension_semantics = [#tpu.dimension_semantics<parallel>, #tpu.dimension_semantics<arbitrary>], iteration_bounds = array<i64: 1, 1>, scalar_prefetch = 0 : i64, scratch_operands = 1 : i64, tpu.core_type = #tpu.core_type<tc>, window_params = [{transform_indices = @transform_0, window_bounds = array<i64: 64, 64>}, {transform_indices = @transform_1, window_bounds = array<i64: 64, 16>}, {pipeline_mode = #tpu.pipeline_mode<synchronous>, transform_indices = @transform_2, window_bounds = array<i64: 16, 32>}, {pipeline_mode = #tpu.pipeline_mode<synchronous>, transform_indices = @transform_3, window_bounds = array<i64: 1, 32>}, {pipeline_mode = #tpu.pipeline_mode<synchronous>, transform_indices = @transform_4, window_bounds = array<i64: 32, 128>}, {transform_indices = @transform_5, window_bounds = array<i64: 64, 128>}]} {
    %c0_i32 = arith.constant 0 : i32
    %0 = arith.cmpi eq, %arg1, %c0_i32 : i32
    %1 = arith.extui %0 : i1 to i32
    %c0_i32_0 = arith.constant 0 : i32
    %2 = arith.cmpi ne, %1, %c0_i32_0 : i32
    scf.if %2 {
      %cst_10 = arith.constant 0.000000e+00 : f32
      %12 = vector.broadcast %cst_10 : f32 to vector<64x16xf32>
      %c0_11 = arith.constant 0 : index
      %c0_12 = arith.constant 0 : index
      %13 = vector.load %arg8[%c0_11, %c0_12] : memref<64x16xf32, #tpu.memory_space<vmem>>, vector<64x16xf32>
      tpu.vector_store %arg8[%c0_11, %c0_12], %12 {strides = array<i32>} : memref<64x16xf32, #tpu.memory_space<vmem>>, vector<64x16xf32>,
    } else {
    }
    %c0 = arith.constant 0 : index
    %c0_1 = arith.constant 0 : index
    %3 = vector.load %arg8[%c0, %c0_1] : memref<64x16xf32, #tpu.memory_space<vmem>>, vector<64x16xf32>
    %c0_2 = arith.constant 0 : index
    %c0_3 = arith.constant 0 : index
    %4 = vector.load %arg2[%c0_2, %c0_3] : memref<64x64xbf16, #tpu.memory_space<vmem>>, vector<64x64xbf16>
    %c0_4 = arith.constant 0 : index
    %c0_5 = arith.constant 0 : index
    %5 = vector.load %arg3[%c0_4, %c0_5] : memref<64x16xbf16, #tpu.memory_space<vmem>>, vector<64x16xbf16>
    %cst = arith.constant dense<0.000000e+00> : vector<64x16xf32>
    %6 = tpu.matmul %4, %5, %cst {dimension_numbers = #tpu.dot_dimension_numbers<[1], [0], [0], [1], [0, 0, 1, 1], [], []>} : vector<64x64xbf16>, vector<64x16xbf16>, vector<64x16xf32> -> vector<64x16xf32>
    %7 = arith.addf %3, %6 : vector<64x16xf32>
    %c0_6 = arith.constant 0 : index
    %c0_7 = arith.constant 0 : index
    %8 = vector.load %arg8[%c0_6, %c0_7] : memref<64x16xf32, #tpu.memory_space<vmem>>, vector<64x16xf32>
    tpu.vector_store %arg8[%c0_6, %c0_7], %7 {strides = array<i32>} : memref<64x16xf32, #tpu.memory_space<vmem>>, vector<64x16xf32>,
    %c0_i32_8 = arith.constant 0 : i32
    %9 = arith.cmpi eq, %arg1, %c0_i32_8 : i32
    %10 = arith.extui %9 : i1 to i32
    %c0_i32_9 = arith.constant 0 : i32
    %11 = arith.cmpi ne, %10, %c0_i32_9 : i32
    scf.if %11 {
      %c0_10 = arith.constant 0 : index
      %c0_11 = arith.constant 0 : index
      %12 = vector.load %arg8[%c0_10, %c0_11] : memref<64x16xf32, #tpu.memory_space<vmem>>, vector<64x16xf32>
      %c0_12 = arith.constant 0 : index
      %c0_13 = arith.constant 0 : index
      %13 = vector.load %arg4[%c0_12, %c0_13] : memref<16x32xf32, #tpu.memory_space<vmem>>, vector<16x32xf32>
      %cst_14 = arith.constant dense<0.000000e+00> : vector<64x32xf32>
      %14 = tpu.matmul %12, %13, %cst_14 {dimension_numbers = #tpu.dot_dimension_numbers<[1], [0], [0], [1], [0, 0, 1, 1], [], []>} : vector<64x16xf32>, vector<16x32xf32>, vector<64x32xf32> -> vector<64x32xf32>
      %c0_15 = arith.constant 0 : index
      %c0_16 = arith.constant 0 : index
      %15 = vector.load %arg5[%c0_15, %c0_16] : memref<1x32xf32, #tpu.memory_space<vmem>>, vector<1x32xf32>
      %16 = vector.broadcast %15 : vector<1x32xf32> to vector<64x32xf32>
      %17 = arith.addf %14, %16 : vector<64x32xf32>
      %cst_17 = arith.constant 0.000000e+00 : f32
      %18 = vector.broadcast %cst_17 : f32 to vector<64x32xf32>
      %19 = arith.maximumf %17, %18 : vector<64x32xf32>
      %c0_18 = arith.constant 0 : index
      %c0_19 = arith.constant 0 : index
      %20 = vector.load %arg6[%c0_18, %c0_19] : memref<32x128xf32, #tpu.memory_space<vmem>>, vector<32x128xf32>
      %cst_20 = arith.constant dense<0.000000e+00> : vector<64x128xf32>
      %21 = tpu.matmul %19, %20, %cst_20 {dimension_numbers = #tpu.dot_dimension_numbers<[1], [0], [0], [1], [0, 0, 1, 1], [], []>} : vector<64x32xf32>, vector<32x128xf32>, vector<64x128xf32> -> vector<64x128xf32>
      %22 = arith.truncf %21 : vector<64x128xf32> to vector<64x128xbf16>
      %c0_21 = arith.constant 0 : index
      %c0_22 = arith.constant 0 : index
      %23 = vector.load %arg7[%c0_21, %c0_22] : memref<64x128xbf16, #tpu.memory_space<vmem>>, vector<64x128xbf16>
      tpu.vector_store %arg7[%c0_21, %c0_22], %22 {strides = array<i32>} : memref<64x128xbf16, #tpu.memory_space<vmem>>, vector<64x128xbf16>,
    } else {
    }
    return
  }
  func.func @transform_0(%arg0: i32, %arg1: i32) -> (i32, i32) {
    %c0_i32 = arith.constant 0 : i32
    return %arg0, %arg1 : i32, i32
  }
  func.func @transform_1(%arg0: i32, %arg1: i32) -> (i32, i32) {
    %c0_i32 = arith.constant 0 : i32
    %c0_i32_0 = arith.constant 0 : i32
    return %arg1, %c0_i32 : i32, i32
  }
  func.func @transform_2(%arg0: i32, %arg1: i32) -> (i32, i32) {
    %c0_i32 = arith.constant 0 : i32
    %c0_i32_0 = arith.constant 0 : i32
    %c0_i32_1 = arith.constant 0 : i32
    return %c0_i32, %c0_i32_0 : i32, i32
  }
  func.func @transform_3(%arg0: i32, %arg1: i32) -> (i32, i32) {
    %c0_i32 = arith.constant 0 : i32
    %c0_i32_0 = arith.constant 0 : i32
    %c0_i32_1 = arith.constant 0 : i32
    return %c0_i32, %c0_i32_0 : i32, i32
  }
  func.func @transform_4(%arg0: i32, %arg1: i32) -> (i32, i32) {
    %c0_i32 = arith.constant 0 : i32
    %c0_i32_0 = arith.constant 0 : i32
    %c0_i32_1 = arith.constant 0 : i32
    return %c0_i32, %c0_i32_0 : i32, i32
  }
  func.func @transform_5(%arg0: i32, %arg1: i32) -> (i32, i32) {
    %c0_i32 = arith.constant 0 : i32
    %c0_i32_0 = arith.constant 0 : i32
    return %arg0, %c0_i32 : i32, i32
  }
}

</mosaic_0001>

<llo_original>
// kernel: tpu_custom_call.1
$region0: #{tpu_custom_call.1}
  #allocation0 [shape = 'u32[]', space=smem, size = 0x4, offset = 0x4, fixed_abs, tag = 'smem constant byte address 0x4 - core index']
  #allocation1 [shape = 'u32[144,128]{1,0:T(1,128)}', space=vmem, size = 0x12000, scoped, tag = 'internal scratch']
  #allocation2 [shape = 'f32[64,16]{1,0:T(8,128)}', space=vmem, size = 0x8000, scoped, tag = 'scratch operand']
  %s0 = inlined_call_operand.vmem [shape: bf16[64,64], index: 0, kind: input, shape index: {}]
  %s1 = inlined_call_operand.vmem [shape: bf16[64,16], index: 1, kind: input, shape index: {}]
  %s2 = inlined_call_operand.hbm [shape: f32[16,32], index: 2, kind: input, shape index: {}]
  %s3 = inlined_call_operand.vmem [shape: f32[1,32], index: 3, kind: input, shape index: {}]
  %s4 = inlined_call_operand.hbm [shape: f32[32,128], index: 4, kind: input, shape index: {}]
  %s5 = inlined_call_operand.hbm [shape: bf16[64,128], index: 5, kind: output, shape index: {}]
  %s6 = sld [smem:[#allocation0]]
  $region46: #{tpu_custom_call.1} parent=0
    _
  %s8 = ssub.s32 1, %s6
  %s9 = scalar_select 0, %s8, %s6
  $region1: #{tpu_custom_call.1} parent=0
    #allocation3 [shape = 'u8[8192]{0}', space=vmem, size = 0x2000, scoped, tag = 'input window, operand 2, single buffered']
    #allocation4 [shape = 's32[1]{0}', space=sflag, size = 0x4, scoped, tag = 'scoped memory for tpu_custom_call.1']
    #allocation5 [shape = 's32[1]{0}', space=sflag, size = 0x4, scoped, tag = 'scoped memory for tpu_custom_call.1']
    #allocation6 [shape = 'u8[16384]{0}', space=vmem, size = 0x4000, scoped, tag = 'input window, operand 4, single buffered']
    #allocation7 [shape = 's32[1]{0}', space=sflag, size = 0x4, scoped, tag = 'scoped memory for tpu_custom_call.1']
    #allocation8 [shape = 'u8[16384]{0}', space=vmem, size = 0x4000, scoped, tag = 'output window, operand 0, single buffered']
    %10 = vsyncpa [#allocation4], 0
    %11 = vsyncpa [#allocation7], 0
    %12 = vsyncpa [#allocation5], 0
    // Predicated region
    $region2: #{tpu_custom_call.1} parent=1 // pred_check
      _
    $region3: #{tpu_custom_call.1} parent=1 // pred_check_branch
      %14 = sbr.rel (0) target = $region5
    $region4: #{tpu_custom_call.1} parent=1 // pred_region
      _
    $region5: #{tpu_custom_call.1} parent=1 // pred_fallthru
      _
    // Predicated region
    $region6: #{tpu_custom_call.1} parent=1 // pred_check
      _
    $region7: #{tpu_custom_call.1} parent=1 // pred_check_branch
      %16 = sbr.rel (0) target = $region9
    $region8: #{tpu_custom_call.1} parent=1 // pred_region
      _
    $region9: #{tpu_custom_call.1} parent=1 // pred_fallthru
      _
    // Predicated region
    $region10: #{tpu_custom_call.1} parent=1 // pred_check
      _
    $region11: #{tpu_custom_call.1} parent=1 // pred_check_branch
      %18 = sbr.rel (0) target = $region13
    $region12: #{tpu_custom_call.1} parent=1 // pred_region
      %s20 = ssub.s32 256, 256
      %21 = vsyncadd [#allocation4], %s20
      %s22 = sshll.u32 [#allocation3], 4
      %s23 = int_to_ptr.vmem [resolvable:$true] %s22
      %28 = dma.hbm_to_vmem [thread:$0]  %s2, 256, %s23, [#allocation4], 128, 128, 8
    $region13: #{tpu_custom_call.1} parent=1 // pred_fallthru
      _
    // Predicated region
    $region14: #{tpu_custom_call.1} parent=1 // pred_check
      _
    $region15: #{tpu_custom_call.1} parent=1 // pred_check_branch
      %30 = sbr.rel (0) target = $region17
    $region16: #{tpu_custom_call.1} parent=1 // pred_region
      _
    $region17: #{tpu_custom_call.1} parent=1 // pred_fallthru
      _
    // Predicated region
    $region18: #{tpu_custom_call.1} parent=1 // pred_check
      _
    $region19: #{tpu_custom_call.1} parent=1 // pred_check_branch
      %32 = sbr.rel (0) target = $region21
    $region20: #{tpu_custom_call.1} parent=1 // pred_region
      %s34 = ssub.s32 512, 512
      %35 = vsyncadd [#allocation7], %s34
      %s36 = sshll.u32 [#allocation6], 4
      %s37 = int_to_ptr.vmem [resolvable:$true] %s36
      %42 = dma.hbm_to_vmem [thread:$0]  %s4, 512, %s37, [#allocation7], 128, 128, 8
    $region21: #{tpu_custom_call.1} parent=1 // pred_fallthru
      _
    // Predicated region
    $region22: #{tpu_custom_call.1} parent=1 // pred_check
      _
    $region23: #{tpu_custom_call.1} parent=1 // pred_check_branch
      %44 = sbr.rel (0) target = $region25
    $region24: #{tpu_custom_call.1} parent=1 // pred_region
      %45 = dma.done [#allocation4], 256
    $region25: #{tpu_custom_call.1} parent=1 // pred_fallthru
      _
    // Predicated region
    $region26: #{tpu_custom_call.1} parent=1 // pred_check
      _
    $region27: #{tpu_custom_call.1} parent=1 // pred_check_branch
      %47 = sbr.rel (0) target = $region29
    $region28: #{tpu_custom_call.1} parent=1 // pred_region
      %48 = dma.done [#allocation7], 512
    $region29: #{tpu_custom_call.1} parent=1 // pred_fallthru
      _
    %p50 = scmp.eq.s32.totalorder 0, 0
    // Predicated region
    $region30: #{tpu_custom_call.1} parent=1 // pred_check
      %p51 = pneg %p50
    $region31: #{tpu_custom_call.1} parent=1 // pred_check_branch
      %53 = sbr.rel (%p51) target = $region33
    $region32: #{tpu_custom_call.1} parent=1 // pred_region
      %vm54 = vcmask 130048
      %55 = vst.msk [vmem:[#allocation2] sm:$0xff] %vm54, 0.0
      %56 = vst.msk [vmem:[#allocation2 + $0x8] sm:$0xff] %vm54, 0.0
      %57 = vst.msk [vmem:[#allocation2 + $0x10] sm:$0xff] %vm54, 0.0
      %58 = vst.msk [vmem:[#allocation2 + $0x18] sm:$0xff] %vm54, 0.0
      %59 = vst.msk [vmem:[#allocation2 + $0x20] sm:$0xff] %vm54, 0.0
      %60 = vst.msk [vmem:[#allocation2 + $0x28] sm:$0xff] %vm54, 0.0
      %61 = vst.msk [vmem:[#allocation2 + $0x30] sm:$0xff] %vm54, 0.0
      %62 = vst.msk [vmem:[#allocation2 + $0x38] sm:$0xff] %vm54, 0.0
    $region33: #{tpu_custom_call.1} parent=1 // pred_fallthru
      _
    %v63 = vld [vmem:[#allocation2] sm:$0xff]
    %v64 = vld [vmem:[#allocation2 + $0x8] sm:$0xff]
    %v65 = vld [vmem:[#allocation2 + $0x10] sm:$0xff]
    %v66 = vld [vmem:[#allocation2 + $0x18] sm:$0xff]
    %v67 = vld [vmem:[#allocation2 + $0x20] sm:$0xff]
    %v68 = vld [vmem:[#allocation2 + $0x28] sm:$0xff]
    %v69 = vld [vmem:[#allocation2 + $0x30] sm:$0xff]
    %v70 = vld [vmem:[#allocation2 + $0x38] sm:$0xff]
    %v71 = vld [vmem:[%s0] sm:$0xf]
    %v72 = vld [vmem:[%s0 + $0x4] sm:$0xf]
    %v73 = vld [vmem:[%s0 + $0x8] sm:$0xf]
    %v74 = vld [vmem:[%s0 + $0xc] sm:$0xf]
    %v75 = vld [vmem:[%s0 + $0x10] sm:$0xf]
    %v76 = vld [vmem:[%s0 + $0x14] sm:$0xf]
    %v77 = vld [vmem:[%s0 + $0x18] sm:$0xf]
    %v78 = vld [vmem:[%s0 + $0x1c] sm:$0xf]
    %v79 = vld [vmem:[%s1] sm:$0xf]
    %v80 = vld [vmem:[%s1 + $0x4] sm:$0xf]
    %v81 = vld [vmem:[%s1 + $0x8] sm:$0xf]
    %v82 = vld [vmem:[%s1 + $0xc] sm:$0xf]
    %v83 = vld [vmem:[%s1 + $0x10] sm:$0xf]
    %v84 = vld [vmem:[%s1 + $0x14] sm:$0xf]
    %v85 = vld [vmem:[%s1 + $0x18] sm:$0xf]
    %v86 = vld [vmem:[%s1 + $0x1c] sm:$0xf]
    %v95 = vunpack.c.l.b16 %v71
    %v96 = vunpack.c.l.b16 %v72
    %v97 = vunpack.c.l.b16 %v73
    %v98 = vunpack.c.l.b16 %v74
    %v99 = vunpack.c.l.b16 %v75
    %v100 = vunpack.c.l.b16 %v76
    %v101 = vunpack.c.l.b16 %v77
    %v102 = vunpack.c.l.b16 %v78
    %v103 = vpack.c.b16 %v96, %v95
    %v104 = vpack.c.b16 %v98, %v97
    %v105 = vpack.c.b16 %v100, %v99
    %v106 = vpack.c.b16 %v102, %v101
    %v115 = vunpack.c.l.b16 %v79
    %v116 = vunpack.c.l.b16 %v80
    %v117 = vunpack.c.l.b16 %v81
    %v118 = vunpack.c.l.b16 %v82
    %v119 = vunpack.c.l.b16 %v83
    %v120 = vunpack.c.l.b16 %v84
    %v121 = vunpack.c.l.b16 %v85
    %v122 = vunpack.c.l.b16 %v86
    %v123 = vpack.c.b16 %v116, %v115
    %v124 = vpack.c.b16 %v118, %v117
    %v125 = vpack.c.b16 %v120, %v119
    %v126 = vpack.c.b16 %v122, %v121
    %vm131 = vcmask 523264
    %v133 = vsel %vm131, %v103, 0
    %v136 = vsel %vm131, %v104, 0
    %v139 = vsel %vm131, %v105, 0
    %v142 = vsel %vm131, %v106, 0
    %144 = vmatprep.subr.bf16.mxu0 0
    %145 = vmatpush1.bf16.msra.mxu0 %v123
    %146 = vmatprep.subr.bf16.mxu0 0
    %147 = vmatpush1.bf16.msra.mxu0 %v124
    %148 = vmatprep.subr.bf16.mxu0 0
    %149 = vmatpush1.bf16.msra.mxu0 %v125
    %150 = vmatprep.subr.bf16.mxu0 0
    %151 = vmatpush1.bf16.msra.mxu0 %v126
    %152 = vmatprep.subr.bf16.mxu0 0
    %153 = vmatpush1.bf16.msra.mxu0 0
    %154 = vmatprep.subr.bf16.mxu0 0
    %155 = vmatpush1.bf16.msra.mxu0 0
    %156 = vmatprep.subr.bf16.mxu0 0
    %157 = vmatpush1.bf16.msra.mxu0 0
    %158 = vmatprep.subr.bf16.mxu0 0
    %159 = vmatpush1.bf16.msra.mxu0 0
    %160 = vmatprep.subr.bf16.mxu0 0
    %161 = vmatpush1.bf16.msra.mxu0 0
    %162 = vmatprep.subr.bf16.mxu0 0
    %163 = vmatpush1.bf16.msra.mxu0 0
    %164 = vmatprep.subr.bf16.mxu0 0
    %165 = vmatpush1.bf16.msra.mxu0 0
    %166 = vmatprep.subr.bf16.mxu0 0
    %167 = vmatpush1.bf16.msra.mxu0 0
    %168 = vmatprep.subr.bf16.mxu0 0
    %169 = vmatpush1.bf16.msra.mxu0 0
    %170 = vmatprep.subr.bf16.mxu0 0
    %171 = vmatpush1.bf16.msra.mxu0 0
    %172 = vmatprep.subr.bf16.mxu0 0
    %173 = vmatpush1.bf16.msra.mxu0 0
    %174 = vmatprep.subr.bf16.mxu0 0
    %175 = vmatpush1.bf16.msra.mxu0 0
    %176 = vmatprep.mubr.bf16.mxu0 0
    %177 = vmatmul.mubr.bf16.gmra.mrb[0].mxu0 %v133
    %v178 = vpop.f32.mrb[0].mxu0
    %v179 = vadd.f32 0.0, %v178
    %v180 = vpop.f32.mrb[0].mxu0
    %v181 = vpop.f32.mrb[0].mxu0
    %v182 = vadd.f32 0.0, %v181
    %v183 = vpop.f32.mrb[0].mxu0
    %184 = vmatprep.mubr.bf16.mxu0 0
    %185 = vmatmul.mubr.bf16.gmra.mrb[0].mxu0 %v136
    %v186 = vpop.f32.mrb[0].mxu0
    %v187 = vadd.f32 0.0, %v186
    %v188 = vpop.f32.mrb[0].mxu0
    %v189 = vpop.f32.mrb[0].mxu0
    %v190 = vadd.f32 0.0, %v189
    %v191 = vpop.f32.mrb[0].mxu0
    %192 = vmatprep.mubr.bf16.mxu0 0
    %193 = vmatmul.mubr.bf16.gmra.mrb[0].mxu0 %v139
    %v194 = vpop.f32.mrb[0].mxu0
    %v195 = vadd.f32 0.0, %v194
    %v196 = vpop.f32.mrb[0].mxu0
    %v197 = vpop.f32.mrb[0].mxu0
    %v198 = vadd.f32 0.0, %v197
    %v199 = vpop.f32.mrb[0].mxu0
    %200 = vmatprep.mubr.bf16.mxu0 0
    %201 = vmatmul.mubr.bf16.gmra.mrb[0].mxu0 %v142
    %v202 = vpop.f32.mrb[0].mxu0
    %v203 = vadd.f32 0.0, %v202
    %v204 = vpop.f32.mrb[0].mxu0
    %v205 = vpop.f32.mrb[0].mxu0
    %v206 = vadd.f32 0.0, %v205
    %v207 = vpop.f32.mrb[0].mxu0
    %208 = vdwg.mxu0
    %v209 = vadd.f32 %v63, %v179
    %v210 = vadd.f32 %v64, %v182
    %v211 = vadd.f32 %v65, %v187
    %v212 = vadd.f32 %v66, %v190
    %v213 = vadd.f32 %v67, %v195
    %v214 = vadd.f32 %v68, %v198
    %v215 = vadd.f32 %v69, %v203
    %v216 = vadd.f32 %v70, %v206
    %vm217 = vcmask 130048
    %218 = vst.msk [vmem:[#allocation2] sm:$0xff] %vm217, %v209
    %219 = vst.msk [vmem:[#allocation2 + $0x8] sm:$0xff] %vm217, %v210
    %220 = vst.msk [vmem:[#allocation2 + $0x10] sm:$0xff] %vm217, %v211
    %221 = vst.msk [vmem:[#allocation2 + $0x18] sm:$0xff] %vm217, %v212
    %222 = vst.msk [vmem:[#allocation2 + $0x20] sm:$0xff] %vm217, %v213
    %223 = vst.msk [vmem:[#allocation2 + $0x28] sm:$0xff] %vm217, %v214
    %224 = vst.msk [vmem:[#allocation2 + $0x30] sm:$0xff] %vm217, %v215
    %225 = vst.msk [vmem:[#allocation2 + $0x38] sm:$0xff] %vm217, %v216
    // Predicated region
    $region34: #{tpu_custom_call.1} parent=1 // pred_check
      %p226 = pneg %p50
    $region35: #{tpu_custom_call.1} parent=1 // pred_check_branch
      %228 = sbr.rel (%p226) target = $region37
    $region36: #{tpu_custom_call.1} parent=1 // pred_region
      %v229 = vld [vmem:[#allocation2] sm:$0xff]
      %v230 = vld [vmem:[#allocation2 + $0x8] sm:$0xff]
      %v231 = vld [vmem:[#allocation2 + $0x10] sm:$0xff]
      %v232 = vld [vmem:[#allocation2 + $0x18] sm:$0xff]
      %v233 = vld [vmem:[#allocation2 + $0x20] sm:$0xff]
      %v234 = vld [vmem:[#allocation2 + $0x28] sm:$0xff]
      %v235 = vld [vmem:[#allocation2 + $0x30] sm:$0xff]
      %v236 = vld [vmem:[#allocation2 + $0x38] sm:$0xff]
      %v237 = vld [vmem:[#allocation3] sm:$0xff]
      %v238 = vld [vmem:[#allocation3 + $0x8] sm:$0xff]
      %v239 = vld [vmem:[%s3] sm:$0x1]
      %v241 = vlaneseq
      %v242 = vshrl.u32 %v241, 7
      %v243 = vsub.s32 0, %v242
      %v244 = vrot.slane %v239, %v243
      %v247 = vsel %vm217, %v229, 0
      %v250 = vsel %vm217, %v230, 0
      %v253 = vsel %vm217, %v231, 0
      %v256 = vsel %vm217, %v232, 0
      %v259 = vsel %vm217, %v233, 0
      %v262 = vsel %vm217, %v234, 0
      %v265 = vsel %vm217, %v235, 0
      %v268 = vsel %vm217, %v236, 0
      %270 = vmatprep.subr.mxu0 0.0
      %271 = vmatpush1.msra.mxu0 %v237
      %272 = vmatprep.subr.mxu0 0.0
      %273 = vmatpush1.msra.mxu0 %v238
      %274 = vmatprep.subr.mxu0 0.0
      %275 = vmatpush1.msra.mxu0 0.0
      %276 = vmatprep.subr.mxu0 0.0
      %277 = vmatpush1.msra.mxu0 0.0
      %278 = vmatprep.subr.mxu0 0.0
      %279 = vmatpush1.msra.mxu0 0.0
      %280 = vmatprep.subr.mxu0 0.0
      %281 = vmatpush1.msra.mxu0 0.0
      %282 = vmatprep.subr.mxu0 0.0
      %283 = vmatpush1.msra.mxu0 0.0
      %284 = vmatprep.subr.mxu0 0.0
      %285 = vmatpush1.msra.mxu0 0.0
      %286 = vmatprep.subr.mxu0 0.0
      %287 = vmatpush1.msra.mxu0 0.0
      %288 = vmatprep.subr.mxu0 0.0
      %289 = vmatpush1.msra.mxu0 0.0
      %290 = vmatprep.subr.mxu0 0.0
      %291 = vmatpush1.msra.mxu0 0.0
      %292 = vmatprep.subr.mxu0 0.0
      %293 = vmatpush1.msra.mxu0 0.0
      %294 = vmatprep.subr.mxu0 0.0
      %295 = vmatpush1.msra.mxu0 0.0
      %296 = vmatprep.subr.mxu0 0.0
      %297 = vmatpush1.msra.mxu0 0.0
      %298 = vmatprep.subr.mxu0 0.0
      %299 = vmatpush1.msra.mxu0 0.0
      %300 = vmatprep.subr.mxu0 0.0
      %301 = vmatpush1.msra.mxu0 0.0
      %302 = vmatprep.subr.mxu0 0.0
      %303 = vmatpush1.msra.mxu0 0.0
      %304 = vmatprep.subr.mxu0 0.0
      %305 = vmatpush1.msra.mxu0 0.0
      %306 = vmatprep.subr.mxu0 0.0
      %307 = vmatpush1.msra.mxu0 0.0
      %308 = vmatprep.subr.mxu0 0.0
      %309 = vmatpush1.msra.mxu0 0.0
      %310 = vmatprep.subr.mxu0 0.0
      %311 = vmatpush1.msra.mxu0 0.0
      %312 = vmatprep.subr.mxu0 0.0
      %313 = vmatpush1.msra.mxu0 0.0
      %314 = vmatprep.subr.mxu0 0.0
      %315 = vmatpush1.msra.mxu0 0.0
      %316 = vmatprep.subr.mxu0 0.0
      %317 = vmatpush1.msra.mxu0 0.0
      %318 = vmatprep.subr.mxu0 0.0
      %319 = vmatpush1.msra.mxu0 0.0
      %320 = vmatprep.subr.mxu0 0.0
      %321 = vmatpush1.msra.mxu0 0.0
      %322 = vmatprep.subr.mxu0 0.0
      %323 = vmatpush1.msra.mxu0 0.0
      %324 = vmatprep.subr.mxu0 0.0
      %325 = vmatpush1.msra.mxu0 0.0
      %326 = vmatprep.subr.mxu0 0.0
      %327 = vmatpush1.msra.mxu0 0.0
      %328 = vmatprep.subr.mxu0 0.0
      %329 = vmatpush1.msra.mxu0 0.0
      %330 = vmatprep.subr.mxu0 0.0
      %331 = vmatpush1.msra.mxu0 0.0
      %332 = vmatprep.subr.mxu0 0.0
      %333 = vmatpush1.msra.mxu0 0.0
      %334 = vmatprep.mubr.f32.mxu0 0.0
      %335 = vmatmul.mubr.f32.gmra.mrb[0].mxu0 %v247
      %v336 = vpop.f32.mrb[0].mxu0
      %v337 = vadd.f32 %v244, %v336
      %v338 = vpop.f32.mrb[0].mxu0
      %339 = vmatprep.mubr.f32.mxu0 0.0
      %340 = vmatmul.mubr.f32.gmra.mrb[0].mxu0 %v250
      %v341 = vpop.f32.mrb[0].mxu0
      %v342 = vadd.f32 %v244, %v341
      %v343 = vpop.f32.mrb[0].mxu0
      %344 = vmatprep.mubr.f32.mxu0 0.0
      %345 = vmatmul.mubr.f32.gmra.mrb[0].mxu0 %v253
      %v346 = vpop.f32.mrb[0].mxu0
      %v347 = vadd.f32 %v244, %v346
      %v348 = vpop.f32.mrb[0].mxu0
      %349 = vmatprep.mubr.f32.mxu0 0.0
      %350 = vmatmul.mubr.f32.gmra.mrb[0].mxu0 %v256
      %v351 = vpop.f32.mrb[0].mxu0
      %v352 = vadd.f32 %v244, %v351
      %v353 = vpop.f32.mrb[0].mxu0
      %354 = vmatprep.mubr.f32.mxu0 0.0
      %355 = vmatmul.mubr.f32.gmra.mrb[0].mxu0 %v259
      %v356 = vpop.f32.mrb[0].mxu0
      %v357 = vadd.f32 %v244, %v356
      %v358 = vpop.f32.mrb[0].mxu0
      %359 = vmatprep.mubr.f32.mxu0 0.0
      %360 = vmatmul.mubr.f32.gmra.mrb[0].mxu0 %v262
      %v361 = vpop.f32.mrb[0].mxu0
      %v362 = vadd.f32 %v244, %v361
      %v363 = vpop.f32.mrb[0].mxu0
      %364 = vmatprep.mubr.f32.mxu0 0.0
      %365 = vmatmul.mubr.f32.gmra.mrb[0].mxu0 %v265
      %v366 = vpop.f32.mrb[0].mxu0
      %v367 = vadd.f32 %v244, %v366
      %v368 = vpop.f32.mrb[0].mxu0
      %369 = vmatprep.mubr.f32.mxu0 0.0
      %370 = vmatmul.mubr.f32.gmra.mrb[0].mxu0 %v268
      %v371 = vpop.f32.mrb[0].mxu0
      %v372 = vadd.f32 %v244, %v371
      %v373 = vpop.f32.mrb[0].mxu0
      %374 = vdwg.mxu0
      %v375 = vmax.f32 %v337, 0.0
      %v376 = vmax.f32 %v342, 0.0
      %v377 = vmax.f32 %v347, 0.0
      %v378 = vmax.f32 %v352, 0.0
      %v379 = vmax.f32 %v357, 0.0
      %v380 = vmax.f32 %v362, 0.0
      %v381 = vmax.f32 %v367, 0.0
      %v382 = vmax.f32 %v372, 0.0
      %v383 = vld [vmem:[#allocation6] sm:$0xff]
      %v384 = vld [vmem:[#allocation6 + $0x8] sm:$0xff]
      %v385 = vld [vmem:[#allocation6 + $0x10] sm:$0xff]
      %v386 = vld [vmem:[#allocation6 + $0x18] sm:$0xff]
      %vm387 = vcmask 261120
      %v389 = vsel %vm387, %v375, 0
      %v392 = vsel %vm387, %v376, 0
      %v395 = vsel %vm387, %v377, 0
      %v398 = vsel %vm387, %v378, 0
      %v401 = vsel %vm387, %v379, 0
      %v404 = vsel %vm387, %v380, 0
      %v407 = vsel %vm387, %v381, 0
      %v410 = vsel %vm387, %v382, 0
      %412 = vmatprep.subr.mxu0 0.0
      %413 = vmatpush1.msra.mxu0 %v383
      %414 = vmatprep.subr.mxu0 0.0
      %415 = vmatpush1.msra.mxu0 %v384
      %416 = vmatprep.subr.mxu0 0.0
      %417 = vmatpush1.msra.mxu0 %v385
      %418 = vmatprep.subr.mxu0 0.0
      %419 = vmatpush1.msra.mxu0 %v386
      %420 = vmatprep.subr.mxu0 0.0
      %421 = vmatpush1.msra.mxu0 0.0
      %422 = vmatprep.subr.mxu0 0.0
      %423 = vmatpush1.msra.mxu0 0.0
      %424 = vmatprep.subr.mxu0 0.0
      %425 = vmatpush1.msra.mxu0 0.0
      %426 = vmatprep.subr.mxu0 0.0
      %427 = vmatpush1.msra.mxu0 0.0
      %428 = vmatprep.subr.mxu0 0.0
      %429 = vmatpush1.msra.mxu0 0.0
      %430 = vmatprep.subr.mxu0 0.0
      %431 = vmatpush1.msra.mxu0 0.0
      %432 = vmatprep.subr.mxu0 0.0
      %433 = vmatpush1.msra.mxu0 0.0
      %434 = vmatprep.subr.mxu0 0.0
      %435 = vmatpush1.msra.mxu0 0.0
      %436 = vmatprep.subr.mxu0 0.0
      %437 = vmatpush1.msra.mxu0 0.0
      %438 = vmatprep.subr.mxu0 0.0
      %439 = vmatpush1.msra.mxu0 0.0
      %440 = vmatprep.subr.mxu0 0.0
      %441 = vmatpush1.msra.mxu0 0.0
      %442 = vmatprep.subr.mxu0 0.0
      %443 = vmatpush1.msra.mxu0 0.0
      %444 = vmatprep.subr.mxu0 0.0
      %445 = vmatpush1.msra.mxu0 0.0
      %446 = vmatprep.subr.mxu0 0.0
      %447 = vmatpush1.msra.mxu0 0.0
      %448 = vmatprep.subr.mxu0 0.0
      %449 = vmatpush1.msra.mxu0 0.0
      %450 = vmatprep.subr.mxu0 0.0
      %451 = vmatpush1.msra.mxu0 0.0
      %452 = vmatprep.subr.mxu0 0.0
      %453 = vmatpush1.msra.mxu0 0.0
      %454 = vmatprep.subr.mxu0 0.0
      %455 = vmatpush1.msra.mxu0 0.0
      %456 = vmatprep.subr.mxu0 0.0
      %457 = vmatpush1.msra.mxu0 0.0
      %458 = vmatprep.subr.mxu0 0.0
      %459 = vmatpush1.msra.mxu0 0.0
      %460 = vmatprep.subr.mxu0 0.0
      %461 = vmatpush1.msra.mxu0 0.0
      %462 = vmatprep.subr.mxu0 0.0
      %463 = vmatpush1.msra.mxu0 0.0
      %464 = vmatprep.subr.mxu0 0.0
      %465 = vmatpush1.msra.mxu0 0.0
      %466 = vmatprep.subr.mxu0 0.0
      %467 = vmatpush1.msra.mxu0 0.0
      %468 = vmatprep.subr.mxu0 0.0
      %469 = vmatpush1.msra.mxu0 0.0
      %470 = vmatprep.subr.mxu0 0.0
      %471 = vmatpush1.msra.mxu0 0.0
      %472 = vmatprep.subr.mxu0 0.0
      %473 = vmatpush1.msra.mxu0 0.0
      %474 = vmatprep.subr.mxu0 0.0
      %475 = vmatpush1.msra.mxu0 0.0
      %476 = vmatprep.mubr.f32.mxu0 0.0
      %477 = vmatmul.mubr.f32.gmra.mrb[0].mxu0 %v389
      %v478 = vpop.f32.mrb[0].mxu0
      %v479 = vadd.f32 0.0, %v478
      %v480 = vpop.f32.mrb[0].mxu0
      %481 = vmatprep.mubr.f32.mxu0 0.0
      %482 = vmatmul.mubr.f32.gmra.mrb[0].mxu0 %v392
      %v483 = vpop.f32.mrb[0].mxu0
      %v484 = vadd.f32 0.0, %v483
      %v485 = vpop.f32.mrb[0].mxu0
      %486 = vmatprep.mubr.f32.mxu0 0.0
      %487 = vmatmul.mubr.f32.gmra.mrb[0].mxu0 %v395
      %v488 = vpop.f32.mrb[0].mxu0
      %v489 = vadd.f32 0.0, %v488
      %v490 = vpop.f32.mrb[0].mxu0
      %491 = vmatprep.mubr.f32.mxu0 0.0
      %492 = vmatmul.mubr.f32.gmra.mrb[0].mxu0 %v398
      %v493 = vpop.f32.mrb[0].mxu0
      %v494 = vadd.f32 0.0, %v493
      %v495 = vpop.f32.mrb[0].mxu0
      %496 = vmatprep.mubr.f32.mxu0 0.0
      %497 = vmatmul.mubr.f32.gmra.mrb[0].mxu0 %v401
      %v498 = vpop.f32.mrb[0].mxu0
      %v499 = vadd.f32 0.0, %v498
      %v500 = vpop.f32.mrb[0].mxu0
      %501 = vmatprep.mubr.f32.mxu0 0.0
      %502 = vmatmul.mubr.f32.gmra.mrb[0].mxu0 %v404
      %v503 = vpop.f32.mrb[0].mxu0
      %v504 = vadd.f32 0.0, %v503
      %v505 = vpop.f32.mrb[0].mxu0
      %506 = vmatprep.mubr.f32.mxu0 0.0
      %507 = vmatmul.mubr.f32.gmra.mrb[0].mxu0 %v407
      %v508 = vpop.f32.mrb[0].mxu0
      %v509 = vadd.f32 0.0, %v508
      %v510 = vpop.f32.mrb[0].mxu0
      %511 = vmatprep.mubr.f32.mxu0 0.0
      %512 = vmatmul.mubr.f32.gmra.mrb[0].mxu0 %v410
      %v513 = vpop.f32.mrb[0].mxu0
      %v514 = vadd.f32 0.0, %v513
      %v515 = vpop.f32.mrb[0].mxu0
      %516 = vdwg.mxu0
      %v517 = vpack.c.bf16 %v484, %v479
      %v518 = vpack.c.bf16 %v494, %v489
      %v519 = vpack.c.bf16 %v504, %v499
      %v520 = vpack.c.bf16 %v514, %v509
      %v525 = vunpack.c.l.b16 %v517
      %v526 = vunpack.c.h.b16 %v517
      %v527 = vunpack.c.l.b16 %v518
      %v528 = vunpack.c.h.b16 %v518
      %v529 = vunpack.c.l.b16 %v519
      %v530 = vunpack.c.h.b16 %v519
      %v531 = vunpack.c.l.b16 %v520
      %v532 = vunpack.c.h.b16 %v520
      %v533 = vpack.c.b16 %v525, %v525
      %v534 = vpack.c.b16 %v526, %v526
      %v535 = vpack.c.b16 %v527, %v527
      %v536 = vpack.c.b16 %v528, %v528
      %v537 = vpack.c.b16 %v529, %v529
      %v538 = vpack.c.b16 %v530, %v530
      %v539 = vpack.c.b16 %v531, %v531
      %v540 = vpack.c.b16 %v532, %v532
      %549 = vst [vmem:[#allocation8] sm:$0xf] %v533
      %550 = vst [vmem:[#allocation8 + $0x4] sm:$0xf] %v534
      %551 = vst [vmem:[#allocation8 + $0x8] sm:$0xf] %v535
      %552 = vst [vmem:[#allocation8 + $0xc] sm:$0xf] %v536
      %553 = vst [vmem:[#allocation8 + $0x10] sm:$0xf] %v537
      %554 = vst [vmem:[#allocation8 + $0x14] sm:$0xf] %v538
      %555 = vst [vmem:[#allocation8 + $0x18] sm:$0xf] %v539
      %556 = vst [vmem:[#allocation8 + $0x1c] sm:$0xf] %v540
    $region37: #{tpu_custom_call.1} parent=1 // pred_fallthru
      _
    // Predicated region
    $region38: #{tpu_custom_call.1} parent=1 // pred_check
      _
    $region39: #{tpu_custom_call.1} parent=1 // pred_check_branch
      %558 = sbr.rel (0) target = $region41
    $region40: #{tpu_custom_call.1} parent=1 // pred_region
      %s560 = ssub.s32 512, 512
      %561 = vsyncadd [#allocation5], %s560
      %s562 = sshll.u32 [#allocation8], 4
      %s563 = int_to_ptr.vmem [resolvable:$true] %s562
      %568 = dma.vmem_to_hbm [thread:$0]  %s563, 512, %s5, [#allocation5], 64, 64, 4
    $region41: #{tpu_custom_call.1} parent=1 // pred_fallthru
      _
    // Predicated region
    $region42: #{tpu_custom_call.1} parent=1 // pred_check
      _
    $region43: #{tpu_custom_call.1} parent=1 // pred_check_branch
      %570 = sbr.rel (0) target = $region45
    $region44: #{tpu_custom_call.1} parent=1 // pred_region
      %571 = dma.done [#allocation5], 512
    $region45: #{tpu_custom_call.1} parent=1 // pred_fallthru
      _
    %572 = vsyncpa [#allocation4], 1
    %573 = vsyncpa [#allocation7], 1
    %574 = vsyncpa [#allocation5], 1

</llo_original>
